<compile_context>
chip_gen: v7x
topology: tpu7x:2x2x1
jax: 0.10.0
libtpu: 0.0.40
codegen_flags: <defaults>
</compile_context>

<pallas_src>
import jax
import jax.numpy as jnp
from jax.experimental import pallas as pl
from jax.experimental.pallas import tpu as pltpu

_BATCH_TILE = 256     # 256-512 rows reaches ~85% of HBM roofline; re-derived vs VMEM below.
_OUT_LANES = 128      # lane-dense output slab width (sliced to 1 column outside the kernel).


def _round_up(x, m):
    return ((x + m - 1) // m) * m


# ---------------------------------------------------------------------------
# Kernel
# ---------------------------------------------------------------------------
def _make_mlp_kernel(num_hidden_layers: int):
    """Fused MLP: (X@Wx + S@Ws + b0, ReLU), [Linear+ReLU]*(L-1), then 1-wide Linear + Sigmoid."""

    def kernel(x_ref, s_ref, *refs):
        out_ref = refs[-1]
        p = refs[:-1]  # (wx, ws, b0, [w_i, b_i]*, w_out(1,H), b_out(1,1))

        # Layer 0: split first Linear -> concat is fused into two MXU matmuls (bf16, f32 acc).
        h = jnp.dot(x_ref[...].astype(jnp.bfloat16), p[0][...],
                    preferred_element_type=jnp.float32)
        h = h + jnp.dot(s_ref[...].astype(jnp.bfloat16), p[1][...],
                        preferred_element_type=jnp.float32)
        h = jnp.maximum(h + p[2][...], 0.0)  # bias + ReLU in f32 (v5e VPU has no bf16)

        idx = 3
        for _ in range(num_hidden_layers - 1):
            w = p[idx][...]
            b = p[idx + 1][...]
            idx += 2
            h = jnp.dot(h.astype(jnp.bfloat16), w, preferred_element_type=jnp.float32) + b
            h = jnp.maximum(h, 0.0)

        w_out = p[idx][...]       # (1, H_pad) f32, zero-padded
        b_out = p[idx + 1][...]   # (1, 1)     f32
        # Final N=1 layer as a VPU/XLU reduction instead of a 1-column MXU matmul.
        logit = jnp.sum(h * w_out, axis=-1, keepdims=True) + b_out  # (TB, 1) f32
        sig = jax.nn.sigmoid(logit)
        # Lane-dense store: broadcast across 128 lanes; column 0 is the real result.
        out_ref[...] = jnp.broadcast_to(sig, out_ref.shape).astype(out_ref.dtype)

    return kernel


# ---------------------------------------------------------------------------
# Parameter init (mirrors nn.Linear init; weights stored (in, out), split + 128-padded)
# ---------------------------------------------------------------------------
def discriminator_init(key, x_dim, s_dim, layers="1200", w_dtype=jnp.bfloat16):
    """Returns (params, raw).

    params: dict of kernel-ready parameters (split first layer, hidden dims padded to 128,
            weights in `w_dtype`, biases f32, final layer as a (1, H) row vector).
    raw:    unpadded f32 (W(in,out), b(out,)) list for the pure-JAX reference."""
    widths = [int(w) for w in layers.split()]
    total_dim = x_dim + s_dim
    dims = [total_dim] + widths + [1]

    raw = []
    for i in range(len(dims) - 1):
        fan_in, fan_out = dims[i], dims[i + 1]
        key, kw, kb = jax.random.split(key, 3)
        bound = 1.0 / (fan_in ** 0.5)
        w = jax.random.uniform(kw, (fan_in, fan_out), jnp.float32, -bound, bound)
        b = jax.random.uniform(kb, (fan_out,), jnp.float32, -bound, bound)
        raw.append((w, b))

    h_pads = [_round_up(w, 128) for w in widths]

    # First layer: split by rows (X part / S part), pad output cols to 128 multiple.
    w0, b0 = raw[0]
    h1, h1p = widths[0], h_pads[0]
    wx = jnp.zeros((x_dim, h1p), jnp.float32).at[:, :h1].set(w0[:x_dim])
    ws = jnp.zeros((s_dim, h1p), jnp.float32).at[:, :h1].set(w0[x_dim:])
    b0p = jnp.zeros((1, h1p), jnp.float32).at[0, :h1].set(b0)

    hidden = []
    for li in range(1, len(widths)):
        w, b = raw[li]
        kin, kinp = widths[li - 1], h_pads[li - 1]
        kout, koutp = widths[li], h_pads[li]
        wp = jnp.zeros((kinp, koutp), jnp.float32).at[:kin, :kout].set(w)
        bp = jnp.zeros((1, koutp), jnp.float32).at[0, :kout].set(b)
        hidden.append((wp.astype(w_dtype), bp))

    w_last, b_last = raw[-1]
    klast, klastp = widths[-1], h_pads[-1]
    w_out = jnp.zeros((1, klastp), jnp.float32).at[0, :klast].set(w_last[:, 0])
    b_out = b_last.reshape(1, 1).astype(jnp.float32)

    params = {
        "wx": wx.astype(w_dtype),
        "ws": ws.astype(w_dtype),
        "b0": b0p,
        "hidden": tuple(hidden),
        "w_out": w_out,
        "b_out": b_out,
    }
    return params, raw


# ---------------------------------------------------------------------------
# Pallas wrapper
# ---------------------------------------------------------------------------
@jax.jit
def discriminator_forward(X, S, params):
    B, x_dim = X.shape
    s_dim = S.shape[1]

    wx, ws, b0 = params["wx"], params["ws"], params["b0"]
    hidden = params["hidden"]
    w_out, b_out = params["w_out"], params["b_out"]

    flat_params = [wx, ws, b0]
    for w, b in hidden:
        flat_params.extend([w, b])
    flat_params.extend([w_out, b_out])
    num_hidden_layers = 1 + len(hidden)

    TB = min(_BATCH_TILE, B)
    grid = (pl.cdiv(B, TB),)

    in_specs = [
        pl.BlockSpec((TB, x_dim), lambda i: (i, 0)),
        pl.BlockSpec((TB, s_dim), lambda i: (i, 0)),
    ]
    for p in flat_params:
        # Constant index map -> parameter block stays resident in VMEM across grid steps.
        in_specs.append(pl.BlockSpec(p.shape, lambda i: (0, 0)))

    out_specs = pl.BlockSpec((TB, _OUT_LANES), lambda i: (i, 0))
    out_shape = jax.ShapeDtypeStruct((B, _OUT_LANES), jnp.float32)

    # Cost estimate (advisory for XLA scheduling).
    widths_p = [wx.shape[1]] + [w.shape[1] for w, _ in hidden]
    flops = 2 * B * (x_dim * wx.shape[1] + s_dim * ws.shape[1])
    prev = wx.shape[1]
    for w, _ in hidden:
        flops += 2 * B * prev * w.shape[1]
        prev = w.shape[1]
    flops += 2 * B * prev  # final VPU reduction
    bytes_acc = (X.size * X.dtype.itemsize + S.size * S.dtype.itemsize
                 + sum(p.size * p.dtype.itemsize for p in flat_params)
                 + B * _OUT_LANES * 4)

    # VMEM budget: resident weights + double-buffered input/output tiles + activation temporaries.
    weight_bytes = sum(p.size * p.dtype.itemsize for p in flat_params)
    tile_in = TB * (x_dim * X.dtype.itemsize + s_dim * S.dtype.itemsize)
    tile_out = TB * _OUT_LANES * 4
    max_w = max(widths_p)
    act_bytes = 6 * TB * max_w * 4
    vmem_need = weight_bytes + 2 * (tile_in + tile_out) + act_bytes + (4 << 20)
    vmem_limit = int(min(max(vmem_need, 16 << 20), 48 << 20))  # safe on v7x's 64 MiB VMEM

    out_padded = pl.pallas_call(
        _make_mlp_kernel(num_hidden_layers),
        grid=grid,
        in_specs=in_specs,
        out_specs=out_specs,
        out_shape=out_shape,
        compiler_params=pltpu.CompilerParams(
            dimension_semantics=("parallel",),
            vmem_limit_bytes=vmem_limit,
        ),
        cost_estimate=pl.CostEstimate(
            flops=int(flops), transcendentals=int(B), bytes_accessed=int(bytes_acc)),
    )(X, S, *flat_params)

    return out_padded[:, :1]


# ---------------------------------------------------------------------------
# References
# ---------------------------------------------------------------------------
def _reference_forward_f32(X, S, raw):
    """Pure-JAX f32 reference matching the PyTorch module exactly (unpadded weights)."""
    h = jnp.concatenate([X, S], axis=1)
    for i, (w, b) in enumerate(raw):
        h = h @ w + b
        if i < len(raw) - 1:
            h = jnp.maximum(h, 0.0)
    return jax.nn.sigmoid(h)


def _reference_forward_mirrored(X, S, params):
    """Pure-JAX reference mirroring the kernel's bf16 matmul / padding choices."""
    h = (jnp.dot(X.astype(jnp.bfloat16), params["wx"], preferred_element_type=jnp.float32)
         + jnp.dot(S.astype(jnp.bfloat16), params["ws"], preferred_element_type=jnp.float32)
         + params["b0"])
    h = jnp.maximum(h, 0.0)
    for w, b in params["hidden"]:
        h = jnp.dot(h.astype(jnp.bfloat16), w, preferred_element_type=jnp.float32) + b
        h = jnp.maximum(h, 0.0)
    logit = jnp.sum(h * params["w_out"], axis=-1, keepdims=True) + params["b_out"]
    return jax.nn.sigmoid(logit)


# TODO(synk): dis_loss (MSE training objective) is a training helper, not part of the forward pass.

if __name__ == "__main__":
    # Small shapes consistent with the module (x_dim + s_dim -> hidden -> 1).
    batch, x_dim, s_dim = 8, 32, 16
    layers = "64"  # scaled-down analogue of the default '1200' single hidden layer

    key = jax.random.PRNGKey(0)
    k_param, k_x, k_s = jax.random.split(key, 3)

    params, raw = discriminator_init(k_param, x_dim, s_dim, layers)
    X = jax.random.normal(k_x, (batch, x_dim), jnp.float32)
    S = jax.random.normal(k_s, (batch, s_dim), jnp.float32)

    out = discriminator_forward(X, S, params)
    out = jax.block_until_ready(out)
    assert out.shape == (batch, 1)

    # Strict check vs a reference that mirrors the kernel's bf16/padding arithmetic.
    ref_m = _reference_forward_mirrored(X, S, params)
    assert jnp.allclose(out, ref_m, atol=1e-4, rtol=1e-4), "mismatch vs bf16-mirrored reference"

    # Semantics check vs the full-f32 unpadded PyTorch-equivalent reference (bf16 tolerance).
    ref_f32 = _reference_forward_f32(X, S, raw)
    assert jnp.allclose(out, ref_f32, atol=5e-2, rtol=5e-2), "mismatch vs f32 reference"

    print("KERNEL_OK")
</pallas_src>

<mosaic_0001>
module attributes {stable_mosaic.version = 11 : i64} {
  func.func @kernel(%arg0: i32, %arg1: memref<8x32xf32, #tpu.memory_space<vmem>>, %arg2: memref<8x16xf32, #tpu.memory_space<vmem>>, %arg3: memref<32x128xbf16, #tpu.memory_space<vmem>>, %arg4: memref<16x128xbf16, #tpu.memory_space<vmem>>, %arg5: memref<1x128xf32, #tpu.memory_space<vmem>>, %arg6: memref<1x128xf32, #tpu.memory_space<vmem>>, %arg7: memref<1x1xf32, #tpu.memory_space<vmem>>, %arg8: memref<8x128xf32, #tpu.memory_space<vmem>>) attributes {dimension_semantics = [#tpu.dimension_semantics<parallel>], iteration_bounds = array<i64: 1>, scalar_prefetch = 0 : i64, scratch_operands = 0 : i64, tpu.core_type = #tpu.core_type<tc>, window_params = [{transform_indices = @transform_0, window_bounds = array<i64: 8, 32>}, {transform_indices = @transform_1, window_bounds = array<i64: 8, 16>}, {pipeline_mode = #tpu.pipeline_mode<synchronous>, transform_indices = @transform_2, window_bounds = array<i64: 32, 128>}, {pipeline_mode = #tpu.pipeline_mode<synchronous>, transform_indices = @transform_3, window_bounds = array<i64: 16, 128>}, {pipeline_mode = #tpu.pipeline_mode<synchronous>, transform_indices = @transform_4, window_bounds = array<i64: 1, 128>}, {pipeline_mode = #tpu.pipeline_mode<synchronous>, transform_indices = @transform_5, window_bounds = array<i64: 1, 128>}, {pipeline_mode = #tpu.pipeline_mode<synchronous>, transform_indices = @transform_6, window_bounds = array<i64: 1, 1>}, {transform_indices = @transform_7, window_bounds = array<i64: 8, 128>}]} {
    %c0 = arith.constant 0 : index
    %c0_0 = arith.constant 0 : index
    %0 = vector.load %arg1[%c0, %c0_0] : memref<8x32xf32, #tpu.memory_space<vmem>>, vector<8x32xf32>
    %1 = arith.truncf %0 : vector<8x32xf32> to vector<8x32xbf16>
    %c0_1 = arith.constant 0 : index
    %c0_2 = arith.constant 0 : index
    %2 = vector.load %arg3[%c0_1, %c0_2] : memref<32x128xbf16, #tpu.memory_space<vmem>>, vector<32x128xbf16>
    %cst = arith.constant dense<0.000000e+00> : vector<8x128xf32>
    %3 = tpu.matmul %1, %2, %cst {dimension_numbers = #tpu.dot_dimension_numbers<[1], [0], [0], [1], [0, 0, 1, 1], [], []>} : vector<8x32xbf16>, vector<32x128xbf16>, vector<8x128xf32> -> vector<8x128xf32>
    %c0_3 = arith.constant 0 : index
    %c0_4 = arith.constant 0 : index
    %4 = vector.load %arg2[%c0_3, %c0_4] : memref<8x16xf32, #tpu.memory_space<vmem>>, vector<8x16xf32>
    %5 = arith.truncf %4 : vector<8x16xf32> to vector<8x16xbf16>
    %c0_5 = arith.constant 0 : index
    %c0_6 = arith.constant 0 : index
    %6 = vector.load %arg4[%c0_5, %c0_6] : memref<16x128xbf16, #tpu.memory_space<vmem>>, vector<16x128xbf16>
    %cst_7 = arith.constant dense<0.000000e+00> : vector<8x128xf32>
    %7 = tpu.matmul %5, %6, %cst_7 {dimension_numbers = #tpu.dot_dimension_numbers<[1], [0], [0], [1], [0, 0, 1, 1], [], []>} : vector<8x16xbf16>, vector<16x128xbf16>, vector<8x128xf32> -> vector<8x128xf32>
    %8 = arith.addf %3, %7 : vector<8x128xf32>
    %c0_8 = arith.constant 0 : index
    %c0_9 = arith.constant 0 : index
    %9 = vector.load %arg5[%c0_8, %c0_9] : memref<1x128xf32, #tpu.memory_space<vmem>>, vector<1x128xf32>
    %10 = vector.broadcast %9 : vector<1x128xf32> to vector<8x128xf32>
    %11 = arith.addf %8, %10 : vector<8x128xf32>
    %cst_10 = arith.constant 0.000000e+00 : f32
    %12 = vector.broadcast %cst_10 : f32 to vector<8x128xf32>
    %13 = arith.maximumf %11, %12 : vector<8x128xf32>
    %c0_11 = arith.constant 0 : index
    %c0_12 = arith.constant 0 : index
    %14 = vector.load %arg6[%c0_11, %c0_12] : memref<1x128xf32, #tpu.memory_space<vmem>>, vector<1x128xf32>
    %c0_13 = arith.constant 0 : index
    %c0_14 = arith.constant 0 : index
    %15 = vector.load %arg7[%c0_13, %c0_14] : memref<1x1xf32, #tpu.memory_space<vmem>>, vector<1x1xf32>
    %16 = vector.broadcast %14 : vector<1x128xf32> to vector<8x128xf32>
    %17 = arith.mulf %13, %16 : vector<8x128xf32>
    %cst_15 = arith.constant dense<0.000000e+00> : vector<8xf32>
    %18 = vector.multi_reduction <add>, %17, %cst_15 [1] : vector<8x128xf32> to vector<8xf32>
    %19 = vector.shape_cast %18 : vector<8xf32> to vector<8x1xf32>
    %20 = vector.broadcast %15 : vector<1x1xf32> to vector<8x1xf32>
    %21 = arith.addf %19, %20 : vector<8x1xf32>
    %22 = arith.negf %21 : vector<8x1xf32>
    %23 = math.exp %22 : vector<8x1xf32>
    %cst_16 = arith.constant 1.000000e+00 : f32
    %24 = vector.broadcast %cst_16 : f32 to vector<8x1xf32>
    %25 = arith.addf %24, %23 : vector<8x1xf32>
    %26 = arith.divf %24, %25 : vector<8x1xf32>
    %27 = vector.shape_cast %26 : vector<8x1xf32> to vector<8x1xf32>
    %28 = vector.broadcast %27 : vector<8x1xf32> to vector<8x128xf32>
    %c0_17 = arith.constant 0 : index
    %c0_18 = arith.constant 0 : index
    %29 = vector.load %arg8[%c0_17, %c0_18] : memref<8x128xf32, #tpu.memory_space<vmem>>, vector<8x128xf32>
    tpu.vector_store %arg8[%c0_17, %c0_18], %28 {strides = array<i32>} : memref<8x128xf32, #tpu.memory_space<vmem>>, vector<8x128xf32>,
    return
  }
  func.func @transform_0(%arg0: i32) -> (i32, i32) {
    %c0_i32 = arith.constant 0 : i32
    %c0_i32_0 = arith.constant 0 : i32
    return %arg0, %c0_i32 : i32, i32
  }
  func.func @transform_1(%arg0: i32) -> (i32, i32) {
    %c0_i32 = arith.constant 0 : i32
    %c0_i32_0 = arith.constant 0 : i32
    return %arg0, %c0_i32 : i32, i32
  }
  func.func @transform_2(%arg0: i32) -> (i32, i32) {
    %c0_i32 = arith.constant 0 : i32
    %c0_i32_0 = arith.constant 0 : i32
    %c0_i32_1 = arith.constant 0 : i32
    return %c0_i32, %c0_i32_0 : i32, i32
  }
  func.func @transform_3(%arg0: i32) -> (i32, i32) {
    %c0_i32 = arith.constant 0 : i32
    %c0_i32_0 = arith.constant 0 : i32
    %c0_i32_1 = arith.constant 0 : i32
    return %c0_i32, %c0_i32_0 : i32, i32
  }
  func.func @transform_4(%arg0: i32) -> (i32, i32) {
    %c0_i32 = arith.constant 0 : i32
    %c0_i32_0 = arith.constant 0 : i32
    %c0_i32_1 = arith.constant 0 : i32
    return %c0_i32, %c0_i32_0 : i32, i32
  }
  func.func @transform_5(%arg0: i32) -> (i32, i32) {
    %c0_i32 = arith.constant 0 : i32
    %c0_i32_0 = arith.constant 0 : i32
    %c0_i32_1 = arith.constant 0 : i32
    return %c0_i32, %c0_i32_0 : i32, i32
  }
  func.func @transform_6(%arg0: i32) -> (i32, i32) {
    %c0_i32 = arith.constant 0 : i32
    %c0_i32_0 = arith.constant 0 : i32
    %c0_i32_1 = arith.constant 0 : i32
    return %c0_i32, %c0_i32_0 : i32, i32
  }
  func.func @transform_7(%arg0: i32) -> (i32, i32) {
    %c0_i32 = arith.constant 0 : i32
    %c0_i32_0 = arith.constant 0 : i32
    return %arg0, %c0_i32 : i32, i32
  }
}

</mosaic_0001>

<llo_original>
// kernel: discriminator_forward.1
$region0: #{discriminator_forward.1}
  #allocation0 [shape = 'u32[]', space=smem, size = 0x4, offset = 0x4, fixed_abs, tag = 'smem constant byte address 0x4 - core index']
  #allocation1 [shape = 'u32[144,128]{1,0:T(1,128)}', space=vmem, size = 0x12000, scoped, tag = 'internal scratch']
  #allocation2 [shape = 'f32[1,1]{1,0:T(1,128)S(1)}', space=vmem, size = 0x200, scoped, tag = 'scoped memory for discriminator_forward.1']
  %s0 = inlined_call_operand.hbm [shape: f32[8,32], index: 0, kind: input, shape index: {}]
  %s1 = inlined_call_operand.hbm [shape: f32[8,16], index: 1, kind: input, shape index: {}]
  %s2 = inlined_call_operand.vmem [shape: bf16[32,128], index: 2, kind: input, shape index: {}]
  %s3 = inlined_call_operand.hbm [shape: bf16[16,128], index: 3, kind: input, shape index: {}]
  %s4 = inlined_call_operand.vmem [shape: f32[1,128], index: 4, kind: input, shape index: {}]
  %s5 = inlined_call_operand.vmem [shape: f32[1,128], index: 5, kind: input, shape index: {}]
  %s6 = inlined_call_operand.<no memory space> [shape: f32[1,1], index: 6, kind: input, shape index: {}]
  %s7 = inlined_call_operand.vmem [shape: f32[8,128], index: 7, kind: output, shape index: {}]
  %s8 = sld [smem:[#allocation0]]
  $region50: #{discriminator_forward.1} parent=0
    _
  %s10 = ssub.s32 1, %s8
  %s11 = scalar_select 0, %s10, %s8
  %v12 = vstv %s6
  %13 = vst [vmem:[#allocation2] sm:$0x1] %v12
  $region1: #{discriminator_forward.1} parent=0
    #allocation3 [shape = 'u8[4096]{0}', space=vmem, size = 0x1000, scoped, tag = 'input window, operand 0, single buffered']
    #allocation4 [shape = 's32[1]{0}', space=sflag, size = 0x4, scoped, tag = 'scoped memory for discriminator_forward.1']
    #allocation5 [shape = 'u8[4096]{0}', space=vmem, size = 0x1000, scoped, tag = 'input window, operand 1, single buffered']
    #allocation6 [shape = 's32[1]{0}', space=sflag, size = 0x4, scoped, tag = 'scoped memory for discriminator_forward.1']
    #allocation7 [shape = 'u8[4096]{0}', space=vmem, size = 0x1000, scoped, tag = 'input window, operand 3, single buffered']
    %14 = vsyncpa [#allocation4], 0
    %15 = vsyncpa [#allocation6], 0
    // Predicated region
    $region2: #{discriminator_forward.1} parent=1 // pred_check
      _
    $region3: #{discriminator_forward.1} parent=1 // pred_check_branch
      %17 = sbr.rel (0) target = $region5
    $region4: #{discriminator_forward.1} parent=1 // pred_region
      %s19 = ssub.s32 128, 128
      %20 = vsyncadd [#allocation4], %s19
      %s22 = sshll.u32 [#allocation3], 4
      %s23 = int_to_ptr.vmem [resolvable:$true] %s22
      %25 = dma.hbm_to_vmem [thread:$0]  %s0, 128, %s23, [#allocation4]
    $region5: #{discriminator_forward.1} parent=1 // pred_fallthru
      _
    // Predicated region
    $region6: #{discriminator_forward.1} parent=1 // pred_check
      _
    $region7: #{discriminator_forward.1} parent=1 // pred_check_branch
      %27 = sbr.rel (0) target = $region9
    $region8: #{discriminator_forward.1} parent=1 // pred_region
      %s29 = ssub.s32 128, 128
      %30 = vsyncadd [#allocation6], %s29
      %s32 = sshll.u32 [#allocation5], 4
      %s33 = int_to_ptr.vmem [resolvable:$true] %s32
      %35 = dma.hbm_to_vmem [thread:$0]  %s1, 128, %s33, [#allocation6]
    $region9: #{discriminator_forward.1} parent=1 // pred_fallthru
      _
    // Predicated region
    $region10: #{discriminator_forward.1} parent=1 // pred_check
      _
    $region11: #{discriminator_forward.1} parent=1 // pred_check_branch
      %37 = sbr.rel (0) target = $region13
    $region12: #{discriminator_forward.1} parent=1 // pred_region
      _
    $region13: #{discriminator_forward.1} parent=1 // pred_fallthru
      _
    // Predicated region
    $region14: #{discriminator_forward.1} parent=1 // pred_check
      _
    $region15: #{discriminator_forward.1} parent=1 // pred_check_branch
      %39 = sbr.rel (0) target = $region17
    $region16: #{discriminator_forward.1} parent=1 // pred_region
      %s41 = ssub.s32 128, 128
      %42 = vsyncadd [#allocation6], %s41
      %s43 = sshll.u32 [#allocation7], 4
      %s44 = int_to_ptr.vmem [resolvable:$true] %s43
      %49 = dma.hbm_to_vmem [thread:$0]  %s3, 128, %s44, [#allocation6], 64, 64, 4
    $region17: #{discriminator_forward.1} parent=1 // pred_fallthru
      _
    // Predicated region
    $region18: #{discriminator_forward.1} parent=1 // pred_check
      _
    $region19: #{discriminator_forward.1} parent=1 // pred_check_branch
      %51 = sbr.rel (0) target = $region21
    $region20: #{discriminator_forward.1} parent=1 // pred_region
      _
    $region21: #{discriminator_forward.1} parent=1 // pred_fallthru
      _
    // Predicated region
    $region22: #{discriminator_forward.1} parent=1 // pred_check
      _
    $region23: #{discriminator_forward.1} parent=1 // pred_check_branch
      %53 = sbr.rel (0) target = $region25
    $region24: #{discriminator_forward.1} parent=1 // pred_region
      _
    $region25: #{discriminator_forward.1} parent=1 // pred_fallthru
      _
    // Predicated region
    $region26: #{discriminator_forward.1} parent=1 // pred_check
      _
    $region27: #{discriminator_forward.1} parent=1 // pred_check_branch
      %55 = sbr.rel (0) target = $region29
    $region28: #{discriminator_forward.1} parent=1 // pred_region
      _
    $region29: #{discriminator_forward.1} parent=1 // pred_fallthru
      _
    // Predicated region
    $region30: #{discriminator_forward.1} parent=1 // pred_check
      _
    $region31: #{discriminator_forward.1} parent=1 // pred_check_branch
      %57 = sbr.rel (0) target = $region33
    $region32: #{discriminator_forward.1} parent=1 // pred_region
      %58 = dma.done [#allocation4], 128
    $region33: #{discriminator_forward.1} parent=1 // pred_fallthru
      _
    // Predicated region
    $region34: #{discriminator_forward.1} parent=1 // pred_check
      _
    $region35: #{discriminator_forward.1} parent=1 // pred_check_branch
      %60 = sbr.rel (0) target = $region37
    $region36: #{discriminator_forward.1} parent=1 // pred_region
      %61 = dma.done [#allocation6], 128
    $region37: #{discriminator_forward.1} parent=1 // pred_fallthru
      _
    // Predicated region
    $region38: #{discriminator_forward.1} parent=1 // pred_check
      _
    $region39: #{discriminator_forward.1} parent=1 // pred_check_branch
      %63 = sbr.rel (0) target = $region41
    $region40: #{discriminator_forward.1} parent=1 // pred_region
      %64 = dma.done [#allocation6], 128
    $region41: #{discriminator_forward.1} parent=1 // pred_fallthru
      _
    %v66 = vld [vmem:[#allocation3] sm:$0xff]
    %v67 = vpack.c.bf16 %v66, %v66
    %v68 = vld [vmem:[%s2] sm:$0xf]
    %v69 = vld [vmem:[%s2 + $0x4] sm:$0xf]
    %v70 = vld [vmem:[%s2 + $0x8] sm:$0xf]
    %v71 = vld [vmem:[%s2 + $0xc] sm:$0xf]
    %v72 = vld [vmem:[#allocation5] sm:$0xff]
    %v73 = vpack.c.bf16 %v72, %v72
    %v74 = vld [vmem:[#allocation7] sm:$0xf]
    %v75 = vld [vmem:[#allocation7 + $0x4] sm:$0xf]
    %v78 = vunpack.c.l.b16 %v74
    %v79 = vunpack.c.l.b16 %v75
    %v80 = vpack.c.b16 %v79, %v78
    %vm82 = vcmask 130048
    %v84 = vsel %vm82, %v73, 0
    %86 = vmatprep.subr.bf16.mxu0 0
    %87 = vmatpush1.bf16.msra.mxu0 %v80
    %88 = vmatprep.subr.bf16.mxu0 0
    %89 = vmatpush1.bf16.msra.mxu0 0
    %90 = vmatprep.subr.bf16.mxu0 0
    %91 = vmatpush1.bf16.msra.mxu0 0
    %92 = vmatprep.subr.bf16.mxu0 0
    %93 = vmatpush1.bf16.msra.mxu0 0
    %94 = vmatprep.subr.bf16.mxu0 0
    %95 = vmatpush1.bf16.msra.mxu0 0
    %96 = vmatprep.subr.bf16.mxu0 0
    %97 = vmatpush1.bf16.msra.mxu0 0
    %98 = vmatprep.subr.bf16.mxu0 0
    %99 = vmatpush1.bf16.msra.mxu0 0
    %100 = vmatprep.subr.bf16.mxu0 0
    %101 = vmatpush1.bf16.msra.mxu0 0
    %102 = vmatprep.subr.bf16.mxu0 0
    %103 = vmatpush1.bf16.msra.mxu0 0
    %104 = vmatprep.subr.bf16.mxu0 0
    %105 = vmatpush1.bf16.msra.mxu0 0
    %106 = vmatprep.subr.bf16.mxu0 0
    %107 = vmatpush1.bf16.msra.mxu0 0
    %108 = vmatprep.subr.bf16.mxu0 0
    %109 = vmatpush1.bf16.msra.mxu0 0
    %110 = vmatprep.subr.bf16.mxu0 0
    %111 = vmatpush1.bf16.msra.mxu0 0
    %112 = vmatprep.subr.bf16.mxu0 0
    %113 = vmatpush1.bf16.msra.mxu0 0
    %114 = vmatprep.subr.bf16.mxu0 0
    %115 = vmatpush1.bf16.msra.mxu0 0
    %116 = vmatprep.subr.bf16.mxu0 0
    %117 = vmatpush1.bf16.msra.mxu0 0
    %118 = vmatprep.mubr.bf16.mxu0 0
    %119 = vmatmul.mubr.bf16.gmra.mrb[0].mxu0 %v84
    %v120 = vpop.f32.mrb[0].mxu0
    %v121 = vadd.f32 0.0, %v120
    %v122 = vpop.f32.mrb[0].mxu0
    %v123 = vpop.f32.mrb[0].mxu0
    %v124 = vpop.f32.mrb[0].mxu0
    %125 = vdwg.mxu0
    %v130 = vunpack.c.l.b16 %v68
    %v131 = vunpack.c.l.b16 %v69
    %v132 = vunpack.c.l.b16 %v70
    %v133 = vunpack.c.l.b16 %v71
    %v134 = vpack.c.b16 %v131, %v130
    %v135 = vpack.c.b16 %v133, %v132
    %vm138 = vcmask 261120
    %v140 = vsel %vm138, %v67, 0
    %142 = vmatprep.subr.bf16.mxu0 0
    %143 = vmatpush1.bf16.msra.mxu0 %v134
    %144 = vmatprep.subr.bf16.mxu0 0
    %145 = vmatpush1.bf16.msra.mxu0 %v135
    %146 = vmatprep.subr.bf16.mxu0 0
    %147 = vmatpush1.bf16.msra.mxu0 0
    %148 = vmatprep.subr.bf16.mxu0 0
    %149 = vmatpush1.bf16.msra.mxu0 0
    %150 = vmatprep.subr.bf16.mxu0 0
    %151 = vmatpush1.bf16.msra.mxu0 0
    %152 = vmatprep.subr.bf16.mxu0 0
    %153 = vmatpush1.bf16.msra.mxu0 0
    %154 = vmatprep.subr.bf16.mxu0 0
    %155 = vmatpush1.bf16.msra.mxu0 0
    %156 = vmatprep.subr.bf16.mxu0 0
    %157 = vmatpush1.bf16.msra.mxu0 0
    %158 = vmatprep.subr.bf16.mxu0 0
    %159 = vmatpush1.bf16.msra.mxu0 0
    %160 = vmatprep.subr.bf16.mxu0 0
    %161 = vmatpush1.bf16.msra.mxu0 0
    %162 = vmatprep.subr.bf16.mxu0 0
    %163 = vmatpush1.bf16.msra.mxu0 0
    %164 = vmatprep.subr.bf16.mxu0 0
    %165 = vmatpush1.bf16.msra.mxu0 0
    %166 = vmatprep.subr.bf16.mxu0 0
    %167 = vmatpush1.bf16.msra.mxu0 0
    %168 = vmatprep.subr.bf16.mxu0 0
    %169 = vmatpush1.bf16.msra.mxu0 0
    %170 = vmatprep.subr.bf16.mxu0 0
    %171 = vmatpush1.bf16.msra.mxu0 0
    %172 = vmatprep.subr.bf16.mxu0 0
    %173 = vmatpush1.bf16.msra.mxu0 0
    %174 = vmatprep.mubr.bf16.mxu0 0
    %175 = vmatmul.mubr.bf16.gmra.mrb[0].mxu0 %v140
    %v176 = vpop.f32.mrb[0].mxu0
    %v177 = vadd.f32 %v121, %v176
    %v178 = vpop.f32.mrb[0].mxu0
    %v179 = vpop.f32.mrb[0].mxu0
    %v180 = vpop.f32.mrb[0].mxu0
    %181 = vdwg.mxu0
    %v182 = vld [vmem:[%s4] sm:$0x1]
    %v184 = vlaneseq
    %v185 = vshrl.u32 %v184, 7
    %v186 = vsub.s32 0, %v185
    %v187 = vrot.slane %v182, %v186
    %v189 = vadd.f32 %v177, %v187
    %v190 = vmax.f32 %v189, 0.0
    %v191 = vld [vmem:[%s5] sm:$0x1]
    %v192 = vld [vmem:[#allocation2] sm:$0x1]
    %v194 = vlaneseq
    %v195 = vshrl.u32 %v194, 7
    %v196 = vsub.s32 0, %v195
    %v197 = vrot.slane %v191, %v196
    %v199 = vmul.f32 %v190, %v197
    %200 = vadd.xlane.f32.xlu0 %v199
    %v201 = vpop.xlane.xlu0 %200
    %v203 = vlaneseq
    %v204 = vshrl.u32 %v203, 7
    %v205 = vsub.s32 0, %v204
    %v206 = vrot.slane %v192, %v205
    %v208 = vadd.f32 %v201, %v206
    %v209 = vxor.u32 %v208, 2147483648
    %v210 = vmul.f32 %v209, 1.442695
    %v211 = vpow.pop %v210
    %v212 = vadd.f32 %v211, 1.0
    %v213 = vrcp.pop %v212
    %v214 = vmul.f32 1.0, %v213
    %216 = vset.pattern.permute.xlu0 0
    %217 = vperm.xlu0 %216, %v214
    %v218 = vpop.permute.xlu0 %217
    %220 = vst [vmem:[%s7] sm:$0xff] %v218
    // Predicated region
    $region42: #{discriminator_forward.1} parent=1 // pred_check
      _
    $region43: #{discriminator_forward.1} parent=1 // pred_check_branch
      %222 = sbr.rel (0) target = $region45
    $region44: #{discriminator_forward.1} parent=1 // pred_region
      _
    $region45: #{discriminator_forward.1} parent=1 // pred_fallthru
      _
    // Predicated region
    $region46: #{discriminator_forward.1} parent=1 // pred_check
      _
    $region47: #{discriminator_forward.1} parent=1 // pred_check_branch
      %224 = sbr.rel (0) target = $region49
    $region48: #{discriminator_forward.1} parent=1 // pred_region
      _
    $region49: #{discriminator_forward.1} parent=1 // pred_fallthru
      _
    %225 = vsyncpa [#allocation4], 1
    %226 = vsyncpa [#allocation6], 1

</llo_original>
